<compile_context>
chip_gen: v6e
topology: v6e:2x2x1
jax: 0.10.0
libtpu: 0.0.40
codegen_flags: <defaults>
</compile_context>

<pallas_src>
import math
from typing import Iterable, Tuple, Union

import jax
import jax.numpy as jnp
from jax.experimental import pallas as pl
from jax.experimental.pallas import tpu as pltpu


_LANE_CANDIDATES = (32768, 16384, 8192, 4096, 2048, 1024, 512, 256, 128)


# ---------------------------------------------------------------------------
# Kernels
# ---------------------------------------------------------------------------

def _copy_kernel(x_ref, o_ref):
    # Identity copy of the current VMEM tile.
    o_ref[...] = x_ref[...]


def _dma_copy_kernel(x_hbm, o_hbm, sem):
    # Single HBM->HBM async copy; bypasses VMEM staging entirely.
    cp = pltpu.make_async_copy(x_hbm, o_hbm, sem.at[0])
    cp.start()
    cp.wait()


# ---------------------------------------------------------------------------
# Helpers
# ---------------------------------------------------------------------------

def _as_tuple(s: Union[int, Tuple[int, ...]]) -> Tuple[int, ...]:
    if not isinstance(s, Iterable):
        return (int(s),)
    return tuple(int(d) for d in s)


def _sublane(dtype) -> int:
    # Packed sublane count for the dtype: f32 -> 8, bf16 -> 16, int8/fp8 -> 32.
    return max(8, 32 // jnp.dtype(dtype).itemsize)


def _pick_lane_width(total: int, sub: int):
    # Prefer a wide lane dim (multiple of 128) whose row count is also
    # sublane-aligned; fall back to lane-dense only.
    for w in _LANE_CANDIDATES:
        if total % w == 0 and (total // w) % sub == 0:
            return w
    for w in _LANE_CANDIDATES:
        if total % w == 0:
            return w
    return None


def _target_block_bytes() -> int:
    # Generation-aware block size for the VMEM-staged copy:
    #   v5e  -> 2 MiB (16 MiB scoped-VMEM default; 2 bufs in + 2 out = 8 MiB)
    #   v6e+ -> 4 MiB (32 MiB scoped default; 16 MiB pipeline, higher HBM BW
    #           makes the ~0.35 us/step overhead relatively more expensive)
    try:
        kind = jax.devices()[0].device_kind.lower()
    except Exception:  # pragma: no cover - defensive
        kind = ""
    if "v5 lite" in kind or "v5e" in kind or "v5lite" in kind:
        return 2 * 1024 * 1024
    return 4 * 1024 * 1024


def _pick_block_rows(rows: int, sub: int, target_rows: int) -> int:
    if rows <= target_rows:
        return rows  # full-extent block: always legal, single grid step
    # Prefer a sublane-aligned divisor of `rows` so the last grid step is not
    # a partial (masked vst.msk) block.
    if rows % sub == 0:
        units = rows // sub
        max_units = max(1, target_rows // sub)
        for u in range(min(units, max_units), 0, -1):
            if units % u == 0:
                return u * sub
    # Fallback: sublane-aligned floor (may leave a partial tail block).
    return max(sub, (target_rows // sub) * sub)


def _cost(total: int, itemsize: int) -> pl.CostEstimate:
    # Pure copy: read + write every byte, no flops.
    return pl.CostEstimate(
        flops=0, transcendentals=0, bytes_accessed=2 * total * itemsize)


def _dma_copy(x: jax.Array) -> jax.Array:
    """Materialize a fresh buffer with one HBM->HBM DMA (no VMEM staging)."""
    total = math.prod(x.shape) if x.shape else 1
    itemsize = jnp.dtype(x.dtype).itemsize
    return pl.pallas_call(
        _dma_copy_kernel,
        out_shape=jax.ShapeDtypeStruct(x.shape, x.dtype),
        in_specs=[pl.BlockSpec(memory_space=pl.ANY)],
        out_specs=pl.BlockSpec(memory_space=pl.ANY),
        scratch_shapes=[pltpu.SemaphoreType.DMA((1,))],
        cost_estimate=_cost(total, itemsize),
    )(x)


def _vmem_tiled_copy(x2d: jax.Array, rows: int, lanes: int) -> jax.Array:
    """Lane-dense, double-buffered, tiled VMEM-staged identity copy."""
    dtype = x2d.dtype
    itemsize = jnp.dtype(dtype).itemsize
    sub = _sublane(dtype)
    total = rows * lanes

    target_rows = max(sub, _target_block_bytes() // (lanes * itemsize))
    block_rows = _pick_block_rows(rows, sub, target_rows)
    grid = (pl.cdiv(rows, block_rows),)

    return pl.pallas_call(
        _copy_kernel,
        out_shape=jax.ShapeDtypeStruct((rows, lanes), dtype),
        grid=grid,
        in_specs=[pl.BlockSpec((block_rows, lanes), lambda i: (i, 0))],
        out_specs=pl.BlockSpec((block_rows, lanes), lambda i: (i, 0)),
        compiler_params=pltpu.CompilerParams(
            dimension_semantics=("parallel",)),  # shard across v7x's 2 TCs
        cost_estimate=_cost(total, itemsize),
    )(x2d)


# ---------------------------------------------------------------------------
# Public API (mirrors Reshape.forward)
# ---------------------------------------------------------------------------

def reshape_forward(x: jax.Array,
                    in_shape: Union[int, Tuple[int, ...]],
                    out_shape: Union[int, Tuple[int, ...]]) -> jax.Array:
    """Equivalent of Reshape(in_shape, out_shape).forward(x).

    Fast path: row-major reshape of contiguous data is a metadata-only op in
    XLA, so this issues no kernel and moves no bytes.
    """
    in_shape = _as_tuple(in_shape)
    out_shape = _as_tuple(out_shape)
    n_in = len(in_shape)
    batch_dims = x.shape[:-n_in]
    assert x.shape[-n_in:] == in_shape, (
        f"trailing dims {x.shape[-n_in:]} != in_shape {in_shape}")
    assert math.prod(in_shape) == math.prod(out_shape), (
        "reshape must preserve element count")
    return x.reshape(*batch_dims, *out_shape)


def reshape_forward_materialized(x: jax.Array,
                                 in_shape: Union[int, Tuple[int, ...]],
                                 out_shape: Union[int, Tuple[int, ...]],
                                 *,
                                 in_place: bool = False,
                                 method: str = "dma") -> jax.Array:
    """Same semantics, but (unless in_place) forces a freshly materialized
    output buffer through a Pallas copy.

    method="dma"  : single HBM->HBM async DMA (default; no VMEM staging,
                    no per-grid-step overhead, works for any element count).
    method="vmem" : tiled, lane-dense, double-buffered VMEM-staged copy
                    (generation-aware block size).
    in_place=True : the result aliases x by construction (a reshape view), so
                    no copy is launched at all — copying a buffer onto itself
                    would only double HBM traffic for a bit-identical result.
    """
    in_shape = _as_tuple(in_shape)
    out_shape = _as_tuple(out_shape)
    n_in = len(in_shape)
    batch_dims = x.shape[:-n_in]
    assert x.shape[-n_in:] == in_shape, (
        f"trailing dims {x.shape[-n_in:]} != in_shape {in_shape}")
    assert math.prod(in_shape) == math.prod(out_shape), (
        "reshape must preserve element count")

    final_shape = (*batch_dims, *out_shape)

    if in_place:
        # Aliased output == input buffer: the copy is a functional no-op, so
        # skip the kernel entirely (metadata-only reshape of the same buffer).
        return x.reshape(final_shape)

    if method == "dma":
        return _dma_copy(x.reshape(final_shape))

    if method != "vmem":
        raise ValueError(f"unknown method {method!r}")

    total = math.prod(x.shape) if x.shape else 1
    sub = _sublane(x.dtype)
    lanes = _pick_lane_width(total, sub)
    if lanes is None:
        # Element count not a multiple of 128: no lane-dense 2-D view exists.
        # Still materialize (previous version silently returned a view) via
        # the layout-agnostic HBM->HBM DMA.
        return _dma_copy(x.reshape(final_shape))

    rows = total // lanes
    y2d = _vmem_tiled_copy(x.reshape(rows, lanes), rows, lanes)
    return y2d.reshape(final_shape)


if __name__ == "__main__":
    key = jax.random.PRNGKey(0)

    # Typical VAE usage: collapse a conv feature map (C, H, W) into a flat
    # latent vector.
    in_shape = (4, 16, 16)
    out_shape = (4 * 16 * 16,)

    x = jax.random.normal(key, (2, *in_shape), dtype=jnp.float32)
    y_ref = x.reshape(2, *out_shape)

    # Production path: metadata-only reshape, zero HBM traffic.
    y_fast = reshape_forward(x, in_shape, out_shape)

    # Materialized path, default: single HBM->HBM async DMA.
    y_dma = jax.block_until_ready(
        reshape_forward_materialized(x, in_shape, out_shape, method="dma"))

    # Materialized path, tiled lane-dense VMEM-staged copy.
    y_vmem = jax.block_until_ready(
        reshape_forward_materialized(x, in_shape, out_shape, method="vmem"))

    # In-place request: short-circuits to the metadata-only reshape.
    y_inplace = reshape_forward_materialized(
        x, in_shape, out_shape, in_place=True)

    assert y_dma.shape == (2, 1024) and y_vmem.shape == (2, 1024)
    assert y_dma.dtype == x.dtype and y_vmem.dtype == x.dtype
    assert bool(jnp.array_equal(y_fast, y_ref))
    assert bool(jnp.array_equal(y_dma, y_ref))
    assert bool(jnp.array_equal(y_vmem, y_ref))
    assert bool(jnp.array_equal(y_inplace, y_ref))

    # Non-multiple-of-128 element count: previously returned a view; now the
    # "vmem" request falls back to the DMA copy and still materializes.
    x_odd = jax.random.normal(jax.random.PRNGKey(1), (2, 3, 5), jnp.float32)
    y_odd = jax.block_until_ready(
        reshape_forward_materialized(x_odd, (3, 5), (15,), method="vmem"))
    assert y_odd.shape == (2, 15)
    assert bool(jnp.array_equal(y_odd, x_odd.reshape(2, 15)))

    print("KERNEL_OK")
</pallas_src>

<mosaic_0001>
module attributes {stable_mosaic.version = 11 : i64} {
  func.func @_dma_copy_kernel(%arg0: memref<2x1024xf32, #tpu.memory_space<any>>, %arg1: memref<2x1024xf32, #tpu.memory_space<any>>, %arg2: memref<1x!tpu.dma_semaphore, #tpu.memory_space<semaphore_mem>>) attributes {dimension_semantics = [], scalar_prefetch = 0 : i64, scratch_operands = 1 : i64, tpu.core_type = #tpu.core_type<tc>} {
    %c0_i32 = arith.constant 0 : i32
    %0 = tpu.memref_slice %arg2[%c0_i32] : memref<1x!tpu.dma_semaphore, #tpu.memory_space<semaphore_mem>> -> memref<1x!tpu.dma_semaphore, #tpu.memory_space<semaphore_mem>>
    %1 = tpu.memref_squeeze %0 : memref<1x!tpu.dma_semaphore, #tpu.memory_space<semaphore_mem>> -> memref<!tpu.dma_semaphore, #tpu.memory_space<semaphore_mem>>
    tpu.enqueue_dma source(%arg0 : memref<2x1024xf32, #tpu.memory_space<any>>) target(%arg1 : memref<2x1024xf32, #tpu.memory_space<any>>) target_semaphore(%1 : memref<!tpu.dma_semaphore, #tpu.memory_space<semaphore_mem>>)
    %c0_i32_0 = arith.constant 0 : i32
    %2 = tpu.memref_slice %arg2[%c0_i32_0] : memref<1x!tpu.dma_semaphore, #tpu.memory_space<semaphore_mem>> -> memref<1x!tpu.dma_semaphore, #tpu.memory_space<semaphore_mem>>
    %3 = tpu.memref_squeeze %2 : memref<1x!tpu.dma_semaphore, #tpu.memory_space<semaphore_mem>> -> memref<!tpu.dma_semaphore, #tpu.memory_space<semaphore_mem>>
    tpu.wait_dma2 semaphore(%3 : memref<!tpu.dma_semaphore, #tpu.memory_space<semaphore_mem>>) src(%arg0 : memref<2x1024xf32, #tpu.memory_space<any>>) dst(%arg1 : memref<2x1024xf32, #tpu.memory_space<any>>)
    return
  }
}

</mosaic_0001>

<llo_original>
// kernel: tpu_custom_call.1
$region0: #{tpu_custom_call.1}
  #allocation0 [shape = 'u32[]', space=smem, size = 0x4, offset = 0x4, fixed_abs, tag = 'smem constant byte address 0x4 - core index']
  #allocation1 [shape = 'u32[144,128]{1,0:T(1,128)}', space=vmem, size = 0x12000, scoped, tag = 'internal scratch']
  #allocation2 [shape = 's32[1]{0}', space=sflag, size = 0x4, scoped, tag = 'scratch operand']
  #allocation3 [shape = 's32[]', space=sflag, size = 0x4, offset = 0, fixed_abs, tag = 'sflag constant byte address 0x0 - dummy sync flag']
  #allocation4 [shape = 'u32[0]{0}', space=smem, size = 0, offset = 0, fixed_abs, tag = 'smem constant byte address 0x0 - null']
  %s0 = inlined_call_operand.hbm [shape: f32[2,1024], index: 0, kind: input, shape index: {}]
  %s1 = inlined_call_operand.hbm [shape: f32[2,1024], index: 1, kind: output, shape index: {}]
  %s2 = sld [smem:[#allocation0]]
  $region2: #{tpu_custom_call.1} parent=0
    _
  %s4 = ssub.s32 1, %s2
  %s5 = scalar_select 0, %s4, %s2
  %s7 = sshll.u32 1, 14
  %s8 = sxor.u32 4294967295, %s7
  %12 = dma.general %s0, 256, %s1, [#allocation2], 131072, [#allocation4], 0, 0
  %s13 = smul.u32 2, 1
  %s14 = smul.u32 %s13, 8
  %s15 = sshll.u32 %s14, 4
  %16 = dma.done [#allocation2], %s15
  %17 = vsyncmov [#allocation2]
  %s18 = vpop.sfrf %17
  %p19 = scmp.eq.s32.totalorder %s18, 0
  %p20 = pneg %p19
  %22 = shalt.err (%p20)

</llo_original>
